<compile_context>
chip_gen: v6e
topology: v6e:2x2x1
jax: 0.10.0
libtpu: 0.0.40
codegen_flags: <defaults>
</compile_context>

<pallas_src>
import jax
import jax.numpy as jnp
import numpy as np
from jax.experimental import pallas as pl
from jax.experimental.pallas import tpu as pltpu


# ----------------------------------------------------------------------------
# Kernel
# ----------------------------------------------------------------------------
def _attention_type_kernel(wt_ref, wr_ref, tat_ref, tar_ref, et_ref, er_ref,
                           trusts_ref, rates_ref, out_t_ref, out_r_ref):
    """One block of `bb` independent nodes, lane-dense layout.

    wt_ref     : (Nt*D, Nt)  block-diag na_nei "segment dot" matrix (constant)
    wr_ref     : (Nr*D, Nr)
    tat_ref    : (1, Nt*D)   ta_nei tiled Nt times (constant)
    tar_ref    : (1, Nr*D)
    et_ref     : (Nt, Nt*D)  0/1 expansion matrix (constant)
    er_ref     : (Nr, Nr*D)
    trusts_ref : (bb, Nt*D)  flattened trust-neighbor embeddings
    rates_ref  : (bb, Nr*D)
    out_*_ref  : same shapes as trusts/rates
    """
    f32 = jnp.float32
    t = trusts_ref[...].astype(f32)                                   # (bb, Nt*D)
    r = rates_ref[...].astype(f32)                                    # (bb, Nr*D)

    # Per-neighbor "na_nei" dots: one small MXU matmul per group against the
    # constant block-diagonal segment-dot matrix.  (node . na_node is a
    # constant shift inside each neighbor softmax -> dropped.)
    t_logits = jnp.dot(t, wt_ref[...], preferred_element_type=f32)    # (bb, Nt)
    r_logits = jnp.dot(r, wr_ref[...], preferred_element_type=f32)    # (bb, Nr)

    # Type-level logits: sum over all neighbors of (nei . ta_nei) == one dense
    # lane reduction against the tiled ta_nei row.  (node . ta_node cancels.)
    a0 = jnp.sum(t * tat_ref[...], axis=-1, keepdims=True)            # (bb, 1)
    a1 = jnp.sum(r * tar_ref[...], axis=-1, keepdims=True)            # (bb, 1)

    # --- type-level softmax over the 2 types (exact division) ---------------
    m = jnp.maximum(a0, a1)
    e0 = jnp.exp(a0 - m)
    e1 = jnp.exp(a1 - m)
    inv = 1.0 / (e0 + e1)
    A0 = e0 * inv                                                      # (bb, 1)
    A1 = e1 * inv

    # --- node-level softmax over the neighbors of each group ----------------
    t_p = jnp.exp(t_logits - jnp.max(t_logits, axis=-1, keepdims=True))
    t_B = t_p / jnp.sum(t_p, axis=-1, keepdims=True)                  # (bb, Nt)
    r_p = jnp.exp(r_logits - jnp.max(r_logits, axis=-1, keepdims=True))
    r_B = r_p / jnp.sum(r_p, axis=-1, keepdims=True)                  # (bb, Nr)

    # Broadcast the (bb, N) scales back to the lane-dense (bb, N*D) layout with
    # the constant 0/1 expansion matmul, then one dense multiply + unmasked
    # store per group.  Re-read the refs here (instead of reusing t/r) so the
    # big tiles are not held live across the softmax math.
    t_scale = jnp.dot(A0 * t_B, et_ref[...], preferred_element_type=f32)   # (bb, Nt*D)
    r_scale = jnp.dot(A1 * r_B, er_ref[...], preferred_element_type=f32)   # (bb, Nr*D)
    out_t_ref[...] = (t_scale * trusts_ref[...].astype(f32)).astype(out_t_ref.dtype)
    out_r_ref[...] = (r_scale * rates_ref[...].astype(f32)).astype(out_r_ref.dtype)


# ----------------------------------------------------------------------------
# Wrapper helpers
# ----------------------------------------------------------------------------
def _round_up(x, m):
    return ((x + m - 1) // m) * m


def _pick_block(B, block_b, step):
    """Node-block size: a multiple of `step`, <= block_b, preferring a divisor
    of B (no pad/slice HBM copies) and capped so the grid keeps >= 2 steps
    whenever B is large enough (both v7x TensorCores get work)."""
    cap = max(step, (min(block_b, B) // step) * step)
    two_step_cap = max(step, ((B // 2) // step) * step)
    cap = min(cap, two_step_cap)
    for bb in range(cap, step - 1, -step):
        if B % bb == 0:
            return bb
    return cap  # fall back to padding the ragged tail block


def _segment_dot_matrix(n, d, vec, dtype):
    """(n*d, n): column j holds `vec` in rows j*d .. j*d+d-1 (block diagonal)."""
    eye = jnp.eye(n, dtype=dtype)
    return (eye[:, None, :] * vec.astype(dtype)[None, :, None]).reshape(n * d, n)


def _expand_matrix(n, d, dtype):
    """(n, n*d) 0/1 matrix: row j is 1 on columns j*d .. j*d+d-1."""
    return jnp.repeat(jnp.eye(n, dtype=dtype), d, axis=1)


# ----------------------------------------------------------------------------
# Public entry points
# ----------------------------------------------------------------------------
def attention_type_batched(node_embs, trusts_neis_embs, rates_neis_embs,
                           type_att, node_att, *, block_b=512):
    """Batched forward over B independent nodes.

    node_embs:          (B, D)   -- never DMA'd: its terms cancel inside both softmaxes
    trusts_neis_embs:   (B, Nt, D)
    rates_neis_embs:    (B, Nr, D)
    type_att, node_att: (2D, 1)
    returns ((B, Nt, D), (B, Nr, D)) in the input dtype.
    """
    del node_embs  # node.ta_node / node.na_node are constant shifts inside the softmaxes
    B, Nt, D = trusts_neis_embs.shape
    Nr = rates_neis_embs.shape[1]
    if Nt == 0 or Nr == 0:
        # TODO(synk): guard the empty-neighbor-set case (softmax over 0 rows).
        raise ValueError("Attention_type requires at least one neighbor per type.")

    out_dtype = trusts_neis_embs.dtype
    f32 = jnp.float32

    # Constant operands (built once; constant index_map -> DMA'd once).
    ta_nei = type_att[D:, 0].astype(f32)                     # (D,)
    na_nei = node_att[D:, 0].astype(f32)                     # (D,)
    wt = _segment_dot_matrix(Nt, D, na_nei, f32)             # (Nt*D, Nt)
    wr = _segment_dot_matrix(Nr, D, na_nei, f32)             # (Nr*D, Nr)
    tat = jnp.tile(ta_nei, Nt)[None, :]                      # (1, Nt*D)
    tar = jnp.tile(ta_nei, Nr)[None, :]                      # (1, Nr*D)
    et = _expand_matrix(Nt, D, f32)                          # (Nt, Nt*D)
    er = _expand_matrix(Nr, D, f32)                          # (Nr, Nr*D)

    # Lane-dense flat views (free reshapes).
    trusts = trusts_neis_embs.reshape(B, Nt * D)
    rates = rates_neis_embs.reshape(B, Nr * D)

    # Block size: multiple of 8 (16 for sub-32-bit dtypes, sublane packing).
    step = 8 if jnp.dtype(out_dtype).itemsize >= 4 else 16

    Bk = B
    if Bk < step:                                            # tiny-batch path
        trusts = jnp.pad(trusts, ((0, step - Bk), (0, 0)))
        rates = jnp.pad(rates, ((0, step - Bk), (0, 0)))
        Bk = step
    bb = _pick_block(Bk, block_b, step)
    Bp = _round_up(Bk, bb)
    if Bp != Bk:
        # TODO(synk): mask the ragged tail block's stores in-kernel instead of
        # padding (only reached when no multiple-of-`step` block divides B).
        trusts = jnp.pad(trusts, ((0, Bp - Bk), (0, 0)))
        rates = jnp.pad(rates, ((0, Bp - Bk), (0, 0)))

    grid = (Bp // bb,)
    out_t, out_r = pl.pallas_call(
        _attention_type_kernel,
        out_shape=(jax.ShapeDtypeStruct((Bp, Nt * D), out_dtype),
                   jax.ShapeDtypeStruct((Bp, Nr * D), out_dtype)),
        grid=grid,
        in_specs=[
            pl.BlockSpec((Nt * D, Nt), lambda b: (0, 0)),    # wt  (constant)
            pl.BlockSpec((Nr * D, Nr), lambda b: (0, 0)),    # wr  (constant)
            pl.BlockSpec((1, Nt * D), lambda b: (0, 0)),     # tat (constant)
            pl.BlockSpec((1, Nr * D), lambda b: (0, 0)),     # tar (constant)
            pl.BlockSpec((Nt, Nt * D), lambda b: (0, 0)),    # et  (constant)
            pl.BlockSpec((Nr, Nr * D), lambda b: (0, 0)),    # er  (constant)
            pl.BlockSpec((bb, Nt * D), lambda b: (b, 0)),    # trust neighbors
            pl.BlockSpec((bb, Nr * D), lambda b: (b, 0)),    # rate neighbors
        ],
        out_specs=(
            pl.BlockSpec((bb, Nt * D), lambda b: (b, 0)),
            pl.BlockSpec((bb, Nr * D), lambda b: (b, 0)),
        ),
        compiler_params=pltpu.CompilerParams(
            dimension_semantics=("parallel",)),   # shards the grid across v7x's 2 TCs
    )(wt, wr, tat, tar, et, er, trusts, rates)

    out_t = out_t.reshape(Bp, Nt, D)
    out_r = out_r.reshape(Bp, Nr, D)
    if Bp != B:
        out_t, out_r = out_t[:B], out_r[:B]
    return out_t, out_r


def attention_type_forward(node_emb, trusts_neis_embs, rates_neis_embs,
                           type_att, node_att):
    """Single-node forward matching the PyTorch module's signature."""
    out_t, out_r = attention_type_batched(
        node_emb[None, :], trusts_neis_embs[None], rates_neis_embs[None],
        type_att, node_att, block_b=8)
    return out_t[0], out_r[0]


# ----------------------------------------------------------------------------
# Pure-JAX reference (for correctness checking).  Uses mul+sum instead of `@`
# so the reference itself is exact f32 regardless of the XLA matmul-precision
# default on TPU.
# ----------------------------------------------------------------------------
def _reference(node_emb, trusts, rates, type_att, node_att):
    type_v = type_att[:, 0]
    node_v = node_att[:, 0]

    trusts_rep = trusts.sum(0)
    rates_rep = rates.sum(0)
    type_cat = jnp.stack((trusts_rep, rates_rep), 0)                   # (2, D)
    type_node = jnp.tile(node_emb[None, :], (2, 1))                    # (2, D)
    node_cat_type = jnp.concatenate((type_node, type_cat), axis=1)     # (2, 2D)
    A = jax.nn.softmax(
        jnp.sum(node_cat_type * type_v[None, :], axis=1, keepdims=True), axis=0)

    t_node = jnp.tile(node_emb[None, :], (trusts.shape[0], 1))
    t_cat = jnp.concatenate((t_node, trusts), axis=1)
    t_B = jax.nn.softmax(
        jnp.sum(t_cat * node_v[None, :], axis=1, keepdims=True), axis=0)
    ret_t = A[0] * t_B * trusts

    r_node = jnp.tile(node_emb[None, :], (rates.shape[0], 1))
    r_cat = jnp.concatenate((r_node, rates), axis=1)
    r_B = jax.nn.softmax(
        jnp.sum(r_cat * node_v[None, :], axis=1, keepdims=True), axis=0)
    ret_r = A[1] * r_B * rates
    return ret_t, ret_r


if __name__ == "__main__":
    emb_dim = 32
    n_trusts = 8
    n_rates = 8
    batch = 16

    key = jax.random.PRNGKey(0)
    k1, k2, k3, k4, k5 = jax.random.split(key, 5)
    node_embs = jax.random.normal(k1, (batch, emb_dim), dtype=jnp.float32)
    trusts = jax.random.normal(k2, (batch, n_trusts, emb_dim), dtype=jnp.float32)
    rates = jax.random.normal(k3, (batch, n_rates, emb_dim), dtype=jnp.float32)
    # The module initializes these to ones; use scaled random values here to
    # exercise non-trivial attention weights (ones is a special case).
    type_att = 0.1 * jax.random.normal(k4, (emb_dim * 2, 1), dtype=jnp.float32)
    node_att = 0.1 * jax.random.normal(k5, (emb_dim * 2, 1), dtype=jnp.float32)

    # Batched path: bb=8 (divides B -> no pad/slice copies), grid=(2,) parallel.
    out_t, out_r = attention_type_batched(node_embs, trusts, rates,
                                          type_att, node_att)
    jax.block_until_ready((out_t, out_r))

    ref_t, ref_r = jax.vmap(_reference, in_axes=(0, 0, 0, None, None))(
        node_embs, trusts, rates, type_att, node_att)
    assert np.allclose(np.asarray(out_t), np.asarray(ref_t), rtol=2e-3, atol=2e-4)
    assert np.allclose(np.asarray(out_r), np.asarray(ref_r), rtol=2e-3, atol=2e-4)

    # Single-node path (exact PyTorch module signature).
    s_t, s_r = attention_type_forward(node_embs[0], trusts[0], rates[0],
                                      type_att, node_att)
    jax.block_until_ready((s_t, s_r))
    assert np.allclose(np.asarray(s_t), np.asarray(ref_t[0]), rtol=2e-3, atol=2e-4)
    assert np.allclose(np.asarray(s_r), np.asarray(ref_r[0]), rtol=2e-3, atol=2e-4)

    print("KERNEL_OK")
</pallas_src>

<mosaic_0001>
module attributes {stable_mosaic.version = 11 : i64} {
  func.func @_attention_type_kernel(%arg0: i32, %arg1: memref<256x8xf32, #tpu.memory_space<vmem>>, %arg2: memref<256x8xf32, #tpu.memory_space<vmem>>, %arg3: memref<1x256xf32, #tpu.memory_space<vmem>>, %arg4: memref<1x256xf32, #tpu.memory_space<vmem>>, %arg5: memref<8x256xf32, #tpu.memory_space<vmem>>, %arg6: memref<8x256xf32, #tpu.memory_space<vmem>>, %arg7: memref<8x256xf32, #tpu.memory_space<vmem>>, %arg8: memref<8x256xf32, #tpu.memory_space<vmem>>, %arg9: memref<8x256xf32, #tpu.memory_space<vmem>>, %arg10: memref<8x256xf32, #tpu.memory_space<vmem>>) attributes {dimension_semantics = [#tpu.dimension_semantics<parallel>], iteration_bounds = array<i64: 2>, scalar_prefetch = 0 : i64, scratch_operands = 0 : i64, tpu.core_type = #tpu.core_type<tc>, window_params = [{pipeline_mode = #tpu.pipeline_mode<synchronous>, transform_indices = @transform_0, window_bounds = array<i64: 256, 8>}, {pipeline_mode = #tpu.pipeline_mode<synchronous>, transform_indices = @transform_1, window_bounds = array<i64: 256, 8>}, {pipeline_mode = #tpu.pipeline_mode<synchronous>, transform_indices = @transform_2, window_bounds = array<i64: 1, 256>}, {pipeline_mode = #tpu.pipeline_mode<synchronous>, transform_indices = @transform_3, window_bounds = array<i64: 1, 256>}, {pipeline_mode = #tpu.pipeline_mode<synchronous>, transform_indices = @transform_4, window_bounds = array<i64: 8, 256>}, {pipeline_mode = #tpu.pipeline_mode<synchronous>, transform_indices = @transform_5, window_bounds = array<i64: 8, 256>}, {transform_indices = @transform_6, window_bounds = array<i64: 8, 256>}, {transform_indices = @transform_7, window_bounds = array<i64: 8, 256>}, {transform_indices = @transform_8, window_bounds = array<i64: 8, 256>}, {transform_indices = @transform_9, window_bounds = array<i64: 8, 256>}]} {
    %c0 = arith.constant 0 : index
    %c0_0 = arith.constant 0 : index
    %0 = vector.load %arg7[%c0, %c0_0] : memref<8x256xf32, #tpu.memory_space<vmem>>, vector<8x256xf32>
    %c0_1 = arith.constant 0 : index
    %c0_2 = arith.constant 0 : index
    %1 = vector.load %arg8[%c0_1, %c0_2] : memref<8x256xf32, #tpu.memory_space<vmem>>, vector<8x256xf32>
    %c0_3 = arith.constant 0 : index
    %c0_4 = arith.constant 0 : index
    %2 = vector.load %arg1[%c0_3, %c0_4] : memref<256x8xf32, #tpu.memory_space<vmem>>, vector<256x8xf32>
    %cst = arith.constant dense<0.000000e+00> : vector<8x8xf32>
    %3 = tpu.matmul %0, %2, %cst {dimension_numbers = #tpu.dot_dimension_numbers<[1], [0], [0], [1], [0, 0, 1, 1], [], []>} : vector<8x256xf32>, vector<256x8xf32>, vector<8x8xf32> -> vector<8x8xf32>
    %c0_5 = arith.constant 0 : index
    %c0_6 = arith.constant 0 : index
    %4 = vector.load %arg2[%c0_5, %c0_6] : memref<256x8xf32, #tpu.memory_space<vmem>>, vector<256x8xf32>
    %cst_7 = arith.constant dense<0.000000e+00> : vector<8x8xf32>
    %5 = tpu.matmul %1, %4, %cst_7 {dimension_numbers = #tpu.dot_dimension_numbers<[1], [0], [0], [1], [0, 0, 1, 1], [], []>} : vector<8x256xf32>, vector<256x8xf32>, vector<8x8xf32> -> vector<8x8xf32>
    %c0_8 = arith.constant 0 : index
    %c0_9 = arith.constant 0 : index
    %6 = vector.load %arg3[%c0_8, %c0_9] : memref<1x256xf32, #tpu.memory_space<vmem>>, vector<1x256xf32>
    %7 = vector.broadcast %6 : vector<1x256xf32> to vector<8x256xf32>
    %8 = arith.mulf %0, %7 : vector<8x256xf32>
    %cst_10 = arith.constant dense<0.000000e+00> : vector<8xf32>
    %9 = vector.multi_reduction <add>, %8, %cst_10 [1] : vector<8x256xf32> to vector<8xf32>
    %10 = vector.shape_cast %9 : vector<8xf32> to vector<8x1xf32>
    %c0_11 = arith.constant 0 : index
    %c0_12 = arith.constant 0 : index
    %11 = vector.load %arg4[%c0_11, %c0_12] : memref<1x256xf32, #tpu.memory_space<vmem>>, vector<1x256xf32>
    %12 = vector.broadcast %11 : vector<1x256xf32> to vector<8x256xf32>
    %13 = arith.mulf %1, %12 : vector<8x256xf32>
    %cst_13 = arith.constant dense<0.000000e+00> : vector<8xf32>
    %14 = vector.multi_reduction <add>, %13, %cst_13 [1] : vector<8x256xf32> to vector<8xf32>
    %15 = vector.shape_cast %14 : vector<8xf32> to vector<8x1xf32>
    %16 = arith.maximumf %10, %15 : vector<8x1xf32>
    %17 = arith.subf %10, %16 : vector<8x1xf32>
    %18 = math.exp %17 : vector<8x1xf32>
    %19 = arith.subf %15, %16 : vector<8x1xf32>
    %20 = math.exp %19 : vector<8x1xf32>
    %21 = arith.addf %18, %20 : vector<8x1xf32>
    %cst_14 = arith.constant 1.000000e+00 : f32
    %22 = vector.broadcast %cst_14 : f32 to vector<8x1xf32>
    %23 = arith.divf %22, %21 : vector<8x1xf32>
    %24 = arith.mulf %18, %23 : vector<8x1xf32>
    %25 = arith.mulf %20, %23 : vector<8x1xf32>
    %cst_15 = arith.constant dense<0xFF800000> : vector<8xf32>
    %26 = vector.multi_reduction <maximumf>, %3, %cst_15 [1] : vector<8x8xf32> to vector<8xf32>
    %27 = vector.shape_cast %26 : vector<8xf32> to vector<8x1xf32>
    %28 = vector.broadcast %27 : vector<8x1xf32> to vector<8x8xf32>
    %29 = arith.subf %3, %28 : vector<8x8xf32>
    %30 = math.exp %29 : vector<8x8xf32>
    %cst_16 = arith.constant dense<0.000000e+00> : vector<8xf32>
    %31 = vector.multi_reduction <add>, %30, %cst_16 [1] : vector<8x8xf32> to vector<8xf32>
    %32 = vector.shape_cast %31 : vector<8xf32> to vector<8x1xf32>
    %33 = vector.broadcast %32 : vector<8x1xf32> to vector<8x8xf32>
    %34 = arith.divf %30, %33 : vector<8x8xf32>
    %cst_17 = arith.constant dense<0xFF800000> : vector<8xf32>
    %35 = vector.multi_reduction <maximumf>, %5, %cst_17 [1] : vector<8x8xf32> to vector<8xf32>
    %36 = vector.shape_cast %35 : vector<8xf32> to vector<8x1xf32>
    %37 = vector.broadcast %36 : vector<8x1xf32> to vector<8x8xf32>
    %38 = arith.subf %5, %37 : vector<8x8xf32>
    %39 = math.exp %38 : vector<8x8xf32>
    %cst_18 = arith.constant dense<0.000000e+00> : vector<8xf32>
    %40 = vector.multi_reduction <add>, %39, %cst_18 [1] : vector<8x8xf32> to vector<8xf32>
    %41 = vector.shape_cast %40 : vector<8xf32> to vector<8x1xf32>
    %42 = vector.broadcast %41 : vector<8x1xf32> to vector<8x8xf32>
    %43 = arith.divf %39, %42 : vector<8x8xf32>
    %44 = vector.broadcast %24 : vector<8x1xf32> to vector<8x8xf32>
    %45 = arith.mulf %44, %34 : vector<8x8xf32>
    %c0_19 = arith.constant 0 : index
    %c0_20 = arith.constant 0 : index
    %46 = vector.load %arg5[%c0_19, %c0_20] : memref<8x256xf32, #tpu.memory_space<vmem>>, vector<8x256xf32>
    %cst_21 = arith.constant dense<0.000000e+00> : vector<8x256xf32>
    %47 = tpu.matmul %45, %46, %cst_21 {dimension_numbers = #tpu.dot_dimension_numbers<[1], [0], [0], [1], [0, 0, 1, 1], [], []>} : vector<8x8xf32>, vector<8x256xf32>, vector<8x256xf32> -> vector<8x256xf32>
    %48 = vector.broadcast %25 : vector<8x1xf32> to vector<8x8xf32>
    %49 = arith.mulf %48, %43 : vector<8x8xf32>
    %c0_22 = arith.constant 0 : index
    %c0_23 = arith.constant 0 : index
    %50 = vector.load %arg6[%c0_22, %c0_23] : memref<8x256xf32, #tpu.memory_space<vmem>>, vector<8x256xf32>
    %cst_24 = arith.constant dense<0.000000e+00> : vector<8x256xf32>
    %51 = tpu.matmul %49, %50, %cst_24 {dimension_numbers = #tpu.dot_dimension_numbers<[1], [0], [0], [1], [0, 0, 1, 1], [], []>} : vector<8x8xf32>, vector<8x256xf32>, vector<8x256xf32> -> vector<8x256xf32>
    %c0_25 = arith.constant 0 : index
    %c0_26 = arith.constant 0 : index
    %52 = vector.load %arg7[%c0_25, %c0_26] : memref<8x256xf32, #tpu.memory_space<vmem>>, vector<8x256xf32>
    %53 = arith.mulf %47, %52 : vector<8x256xf32>
    %c0_27 = arith.constant 0 : index
    %c0_28 = arith.constant 0 : index
    %54 = vector.load %arg9[%c0_27, %c0_28] : memref<8x256xf32, #tpu.memory_space<vmem>>, vector<8x256xf32>
    tpu.vector_store %arg9[%c0_27, %c0_28], %53 {strides = array<i32>} : memref<8x256xf32, #tpu.memory_space<vmem>>, vector<8x256xf32>,
    %c0_29 = arith.constant 0 : index
    %c0_30 = arith.constant 0 : index
    %55 = vector.load %arg8[%c0_29, %c0_30] : memref<8x256xf32, #tpu.memory_space<vmem>>, vector<8x256xf32>
    %56 = arith.mulf %51, %55 : vector<8x256xf32>
    %c0_31 = arith.constant 0 : index
    %c0_32 = arith.constant 0 : index
    %57 = vector.load %arg10[%c0_31, %c0_32] : memref<8x256xf32, #tpu.memory_space<vmem>>, vector<8x256xf32>
    tpu.vector_store %arg10[%c0_31, %c0_32], %56 {strides = array<i32>} : memref<8x256xf32, #tpu.memory_space<vmem>>, vector<8x256xf32>,
    return
  }
  func.func @transform_0(%arg0: i32) -> (i32, i32) {
    %c0_i32 = arith.constant 0 : i32
    %c0_i32_0 = arith.constant 0 : i32
    %c0_i32_1 = arith.constant 0 : i32
    return %c0_i32, %c0_i32_0 : i32, i32
  }
  func.func @transform_1(%arg0: i32) -> (i32, i32) {
    %c0_i32 = arith.constant 0 : i32
    %c0_i32_0 = arith.constant 0 : i32
    %c0_i32_1 = arith.constant 0 : i32
    return %c0_i32, %c0_i32_0 : i32, i32
  }
  func.func @transform_2(%arg0: i32) -> (i32, i32) {
    %c0_i32 = arith.constant 0 : i32
    %c0_i32_0 = arith.constant 0 : i32
    %c0_i32_1 = arith.constant 0 : i32
    return %c0_i32, %c0_i32_0 : i32, i32
  }
  func.func @transform_3(%arg0: i32) -> (i32, i32) {
    %c0_i32 = arith.constant 0 : i32
    %c0_i32_0 = arith.constant 0 : i32
    %c0_i32_1 = arith.constant 0 : i32
    return %c0_i32, %c0_i32_0 : i32, i32
  }
  func.func @transform_4(%arg0: i32) -> (i32, i32) {
    %c0_i32 = arith.constant 0 : i32
    %c0_i32_0 = arith.constant 0 : i32
    %c0_i32_1 = arith.constant 0 : i32
    return %c0_i32, %c0_i32_0 : i32, i32
  }
  func.func @transform_5(%arg0: i32) -> (i32, i32) {
    %c0_i32 = arith.constant 0 : i32
    %c0_i32_0 = arith.constant 0 : i32
    %c0_i32_1 = arith.constant 0 : i32
    return %c0_i32, %c0_i32_0 : i32, i32
  }
  func.func @transform_6(%arg0: i32) -> (i32, i32) {
    %c0_i32 = arith.constant 0 : i32
    %c0_i32_0 = arith.constant 0 : i32
    return %arg0, %c0_i32 : i32, i32
  }
  func.func @transform_7(%arg0: i32) -> (i32, i32) {
    %c0_i32 = arith.constant 0 : i32
    %c0_i32_0 = arith.constant 0 : i32
    return %arg0, %c0_i32 : i32, i32
  }
  func.func @transform_8(%arg0: i32) -> (i32, i32) {
    %c0_i32 = arith.constant 0 : i32
    %c0_i32_0 = arith.constant 0 : i32
    return %arg0, %c0_i32 : i32, i32
  }
  func.func @transform_9(%arg0: i32) -> (i32, i32) {
    %c0_i32 = arith.constant 0 : i32
    %c0_i32_0 = arith.constant 0 : i32
    return %arg0, %c0_i32 : i32, i32
  }
}

</mosaic_0001>

<llo_original>
// kernel: tpu_custom_call.1
$region0: #{tpu_custom_call.1}
  #allocation0 [shape = 'u32[]', space=smem, size = 0x4, offset = 0x4, fixed_abs, tag = 'smem constant byte address 0x4 - core index']
  #allocation1 [shape = 'u32[144,128]{1,0:T(1,128)}', space=vmem, size = 0x12000, scoped, tag = 'internal scratch']
  %s0 = inlined_call_operand.vmem [shape: f32[256,8], index: 0, kind: input, shape index: {}]
  %s1 = inlined_call_operand.vmem [shape: f32[256,8], index: 1, kind: input, shape index: {}]
  %s2 = inlined_call_operand.vmem [shape: f32[1,256], index: 2, kind: input, shape index: {}]
  %s3 = inlined_call_operand.vmem [shape: f32[1,256], index: 3, kind: input, shape index: {}]
  %s4 = inlined_call_operand.vmem [shape: f32[8,256], index: 4, kind: input, shape index: {}]
  %s5 = inlined_call_operand.vmem [shape: f32[8,256], index: 5, kind: input, shape index: {}]
  %s6 = inlined_call_operand.vmem [shape: f32[16,256], index: 6, kind: input, shape index: {}]
  %s7 = inlined_call_operand.vmem [shape: f32[16,256], index: 7, kind: input, shape index: {}]
  %s8 = inlined_call_operand.hbm [shape: f32[16,256], index: 8, kind: output, shape index: {0}]
  %s9 = inlined_call_operand.hbm [shape: f32[16,256], index: 9, kind: output, shape index: {1}]
  %10 = xla_tuple %s8, %s9
  %s11 = sld [smem:[#allocation0]]
  $region73: #{tpu_custom_call.1} parent=0
    _
  %s13 = ssub.s32 1, %s11
  %s14 = scalar_select 0, %s13, %s11
  $region1: #{tpu_custom_call.1} parent=0
    #allocation2 [shape = 'u8[16384]{0}', space=vmem, size = 0x4000, scoped, tag = 'output window, operand 0']
    #allocation3 [shape = 's32[2]{0}', space=sflag, size = 0x8, scoped, tag = 'scoped memory for tpu_custom_call.1']
    #allocation4 [shape = 'u8[16384]{0}', space=vmem, size = 0x4000, scoped, tag = 'output window, operand 1']
    #allocation5 [shape = 's32[2]{0}', space=sflag, size = 0x8, scoped, tag = 'scoped memory for tpu_custom_call.1']
    %15 = vsyncpa [#allocation3], 0
    %s16 = scalar_lea.sflag [#allocation3], 1
    %17 = vsyncpa %s16, 0
    %18 = vsyncpa [#allocation5], 0
    %s19 = scalar_lea.sflag [#allocation5], 1
    %20 = vsyncpa %s19, 0
    loop: start=0, step=1, limit=4
    $region2: #{tpu_custom_call.1} parent=1 // loop_pre_header
      _
    $region3: #{tpu_custom_call.1} parent=1 // loop_header
      %s22 = sphi 0, %s26
      %p23 = scmp.ge.s32.totalorder %s22, 4
      %s30 = sphi 0, %s30
      %s32 = sphi 0, %s30
      %s33 = sphi 0, %s32
      %s47 = sphi 0, %s33
      %s51 = sphi 0, %s51
      %s53 = sphi 0, %s51
      %s54 = sphi 0, %s53
      %s68 = sphi 0, %s54
      %s72 = sphi 0, %s72
      %s74 = sphi 0, %s72
      %s75 = sphi 0, %s74
      %s89 = sphi 0, %s75
      %s93 = sphi 0, %s93
      %s95 = sphi 0, %s93
      %s96 = sphi 0, %s95
      %s110 = sphi 0, %s96
      %s114 = sphi 0, %s114
      %s116 = sphi 0, %s114
      %s117 = sphi 0, %s116
      %s131 = sphi 0, %s117
      %s135 = sphi 0, %s135
      %s137 = sphi 0, %s135
      %s138 = sphi 0, %s137
      %s152 = sphi 0, %s138
      %s158 = sphi 0, %s160
      %s161 = sphi 0, %s158
      %s162 = sphi 0, %s161
      %s178 = sphi 0, %s162
      %s184 = sphi 0, %s186
      %s187 = sphi 0, %s184
      %s188 = sphi 0, %s187
      %s204 = sphi 0, %s188
      %s210 = sphi 0, %s212
      %s213 = sphi 0, %s210
      %s214 = sphi 0, %s213
      %s230 = sphi 0, %s214
      %s236 = sphi 0, %s238
      %s239 = sphi 0, %s236
      %s240 = sphi 0, %s239
      %s256 = sphi 0, %s240
    $region4: #{tpu_custom_call.1} parent=1 // loop_header_branch
      %25 = sbr.rel (%p23) target = $region8
    $region5: #{tpu_custom_call.1} parent=1 // loop_body
      %s27 = ssub.s32 %s22, 1
      %s28 = ssub.s32 %s22, 2
      %s29 = sadd.s32 %s22, 1
      %s31 = sadd.s32 %s30, 1
      %p34 = scmp.eq.s32.totalorder %s22, 1
      %p35 = scmp.ne.s32.totalorder %s30, %s32
      %p36 = scmp.eq.s32.totalorder %s22, 0
      %p37 = por %p35, %p36
      %p38 = scmp.ne.s32.totalorder %s30, %s32
      %p39 = scmp.eq.s32.totalorder %s27, 1
      %p40 = por %p38, %p39
      %p41 = scmp.ne.s32.totalorder %s32, %s33
      %p42 = scmp.eq.s32.totalorder %s27, 0
      %p43 = por %p41, %p42
      %p44 = scmp.ne.s32.totalorder %s32, %s33
      %p45 = scmp.eq.s32.totalorder %s28, 1
      %p46 = por %p44, %p45
      %p48 = scmp.ne.s32.totalorder %s33, %s47
      %p49 = scmp.eq.s32.totalorder %s28, 0
      %p50 = por %p48, %p49
      %s52 = sadd.s32 %s51, 1
      %p55 = scmp.eq.s32.totalorder %s22, 1
      %p56 = scmp.ne.s32.totalorder %s51, %s53
      %p57 = scmp.eq.s32.totalorder %s22, 0
      %p58 = por %p56, %p57
      %p59 = scmp.ne.s32.totalorder %s51, %s53
      %p60 = scmp.eq.s32.totalorder %s27, 1
      %p61 = por %p59, %p60
      %p62 = scmp.ne.s32.totalorder %s53, %s54
      %p63 = scmp.eq.s32.totalorder %s27, 0
      %p64 = por %p62, %p63
      %p65 = scmp.ne.s32.totalorder %s53, %s54
      %p66 = scmp.eq.s32.totalorder %s28, 1
      %p67 = por %p65, %p66
      %p69 = scmp.ne.s32.totalorder %s54, %s68
      %p70 = scmp.eq.s32.totalorder %s28, 0
      %p71 = por %p69, %p70
      %s73 = sadd.s32 %s72, 1
      %p76 = scmp.eq.s32.totalorder %s22, 1
      %p77 = scmp.ne.s32.totalorder %s72, %s74
      %p78 = scmp.eq.s32.totalorder %s22, 0
      %p79 = por %p77, %p78
      %p80 = scmp.ne.s32.totalorder %s72, %s74
      %p81 = scmp.eq.s32.totalorder %s27, 1
      %p82 = por %p80, %p81
      %p83 = scmp.ne.s32.totalorder %s74, %s75
      %p84 = scmp.eq.s32.totalorder %s27, 0
      %p85 = por %p83, %p84
      %p86 = scmp.ne.s32.totalorder %s74, %s75
      %p87 = scmp.eq.s32.totalorder %s28, 1
      %p88 = por %p86, %p87
      %p90 = scmp.ne.s32.totalorder %s75, %s89
      %p91 = scmp.eq.s32.totalorder %s28, 0
      %p92 = por %p90, %p91
      %s94 = sadd.s32 %s93, 1
      %p97 = scmp.eq.s32.totalorder %s22, 1
      %p98 = scmp.ne.s32.totalorder %s93, %s95
      %p99 = scmp.eq.s32.totalorder %s22, 0
      %p100 = por %p98, %p99
      %p101 = scmp.ne.s32.totalorder %s93, %s95
      %p102 = scmp.eq.s32.totalorder %s27, 1
      %p103 = por %p101, %p102
      %p104 = scmp.ne.s32.totalorder %s95, %s96
      %p105 = scmp.eq.s32.totalorder %s27, 0
      %p106 = por %p104, %p105
      %p107 = scmp.ne.s32.totalorder %s95, %s96
      %p108 = scmp.eq.s32.totalorder %s28, 1
      %p109 = por %p107, %p108
      %p111 = scmp.ne.s32.totalorder %s96, %s110
      %p112 = scmp.eq.s32.totalorder %s28, 0
      %p113 = por %p111, %p112
      %s115 = sadd.s32 %s114, 1
      %p118 = scmp.eq.s32.totalorder %s22, 1
      %p119 = scmp.ne.s32.totalorder %s114, %s116
      %p120 = scmp.eq.s32.totalorder %s22, 0
      %p121 = por %p119, %p120
      %p122 = scmp.ne.s32.totalorder %s114, %s116
      %p123 = scmp.eq.s32.totalorder %s27, 1
      %p124 = por %p122, %p123
      %p125 = scmp.ne.s32.totalorder %s116, %s117
      %p126 = scmp.eq.s32.totalorder %s27, 0
      %p127 = por %p125, %p126
      %p128 = scmp.ne.s32.totalorder %s116, %s117
      %p129 = scmp.eq.s32.totalorder %s28, 1
      %p130 = por %p128, %p129
      %p132 = scmp.ne.s32.totalorder %s117, %s131
      %p133 = scmp.eq.s32.totalorder %s28, 0
      %p134 = por %p132, %p133
      %s136 = sadd.s32 %s135, 1
      %p139 = scmp.eq.s32.totalorder %s22, 1
      %p140 = scmp.ne.s32.totalorder %s135, %s137
      %p141 = scmp.eq.s32.totalorder %s22, 0
      %p142 = por %p140, %p141
      %p143 = scmp.ne.s32.totalorder %s135, %s137
      %p144 = scmp.eq.s32.totalorder %s27, 1
      %p145 = por %p143, %p144
      %p146 = scmp.ne.s32.totalorder %s137, %s138
      %p147 = scmp.eq.s32.totalorder %s27, 0
      %p148 = por %p146, %p147
      %p149 = scmp.ne.s32.totalorder %s137, %s138
      %p150 = scmp.eq.s32.totalorder %s28, 1
      %p151 = por %p149, %p150
      %p153 = scmp.ne.s32.totalorder %s138, %s152
      %p154 = scmp.eq.s32.totalorder %s28, 0
      %p155 = por %p153, %p154
      %s156 = ssub.s32 %s22, %s29
      %p157 = scmp.eq.s32.totalorder %s156, 0
      %s159 = sadd.s32 %s158, 1
      %s160 = scalar_select %p157, %s158, %s159
      %p163 = pneg %p157
      %p164 = scmp.eq.s32.totalorder %s22, 1
      %p165 = por %p163, %p164
      %p166 = scmp.ne.s32.totalorder %s158, %s161
      %p167 = scmp.eq.s32.totalorder %s22, 0
      %p168 = por %p166, %p167
      %p169 = scmp.ne.s32.totalorder %s158, %s161
      %p170 = scmp.eq.s32.totalorder %s27, 1
      %p171 = por %p169, %p170
      %p172 = scmp.ne.s32.totalorder %s161, %s162
      %p173 = scmp.eq.s32.totalorder %s27, 0
      %p174 = por %p172, %p173
      %p175 = scmp.ne.s32.totalorder %s161, %s162
      %p176 = scmp.eq.s32.totalorder %s28, 1
      %p177 = por %p175, %p176
      %p179 = scmp.ne.s32.totalorder %s162, %s178
      %p180 = scmp.eq.s32.totalorder %s28, 0
      %p181 = por %p179, %p180
      %s182 = ssub.s32 %s22, %s29
      %p183 = scmp.eq.s32.totalorder %s182, 0
      %s185 = sadd.s32 %s184, 1
      %s186 = scalar_select %p183, %s184, %s185
      %p189 = pneg %p183
      %p190 = scmp.eq.s32.totalorder %s22, 1
      %p191 = por %p189, %p190
      %p192 = scmp.ne.s32.totalorder %s184, %s187
      %p193 = scmp.eq.s32.totalorder %s22, 0
      %p194 = por %p192, %p193
      %p195 = scmp.ne.s32.totalorder %s184, %s187
      %p196 = scmp.eq.s32.totalorder %s27, 1
      %p197 = por %p195, %p196
      %p198 = scmp.ne.s32.totalorder %s187, %s188
      %p199 = scmp.eq.s32.totalorder %s27, 0
      %p200 = por %p198, %p199
      %p201 = scmp.ne.s32.totalorder %s187, %s188
      %p202 = scmp.eq.s32.totalorder %s28, 1
      %p203 = por %p201, %p202
      %p205 = scmp.ne.s32.totalorder %s188, %s204
      %p206 = scmp.eq.s32.totalorder %s28, 0
      %p207 = por %p205, %p206
      %s208 = ssub.s32 %s22, %s29
      %p209 = scmp.eq.s32.totalorder %s208, 0
      %s211 = sadd.s32 %s210, 1
      %s212 = scalar_select %p209, %s210, %s211
      %p215 = pneg %p209
      %p216 = scmp.eq.s32.totalorder %s22, 1
      %p217 = por %p215, %p216
      %p218 = scmp.ne.s32.totalorder %s210, %s213
      %p219 = scmp.eq.s32.totalorder %s22, 0
      %p220 = por %p218, %p219
      %p221 = scmp.ne.s32.totalorder %s210, %s213
      %p222 = scmp.eq.s32.totalorder %s27, 1
      %p223 = por %p221, %p222
      %p224 = scmp.ne.s32.totalorder %s213, %s214
      %p225 = scmp.eq.s32.totalorder %s27, 0
      %p226 = por %p224, %p225
      %p227 = scmp.ne.s32.totalorder %s213, %s214
      %p228 = scmp.eq.s32.totalorder %s28, 1
      %p229 = por %p227, %p228
      %p231 = scmp.ne.s32.totalorder %s214, %s230
      %p232 = scmp.eq.s32.totalorder %s28, 0
      %p233 = por %p231, %p232
      %s234 = ssub.s32 %s22, %s29
      %p235 = scmp.eq.s32.totalorder %s234, 0
      %s237 = sadd.s32 %s236, 1
      %s238 = scalar_select %p235, %s236, %s237
      %p241 = pneg %p235
      %p242 = scmp.eq.s32.totalorder %s22, 1
      %p243 = por %p241, %p242
      %p244 = scmp.ne.s32.totalorder %s236, %s239
      %p245 = scmp.eq.s32.totalorder %s22, 0
      %p246 = por %p244, %p245
      %p247 = scmp.ne.s32.totalorder %s236, %s239
      %p248 = scmp.eq.s32.totalorder %s27, 1
      %p249 = por %p247, %p248
      %p250 = scmp.ne.s32.totalorder %s239, %s240
      %p251 = scmp.eq.s32.totalorder %s27, 0
      %p252 = por %p250, %p251
      %p253 = scmp.ne.s32.totalorder %s239, %s240
      %p254 = scmp.eq.s32.totalorder %s28, 1
      %p255 = por %p253, %p254
      %p257 = scmp.ne.s32.totalorder %s240, %s256
      %p258 = scmp.eq.s32.totalorder %s28, 0
      %p259 = por %p257, %p258
      %p260 = scmp.le.s32.totalorder 1, %s22
      %p261 = scmp.lt.s32.totalorder %s22, 3
      %p262 = pnand %p260, %p261
      %p263 = pneg %p262
      // Predicated region
      $region9: #{tpu_custom_call.1} parent=5 // pred_check
        _
      $region10: #{tpu_custom_call.1} parent=5 // pred_check_branch
        %265 = sbr.rel (%p262) target = $region12
      $region11: #{tpu_custom_call.1} parent=5 // pred_region
        %s266 = ssub.s32 %s22, 1
        // Predicated region
        $region13: #{tpu_custom_call.1} parent=11 // pred_check
          %p267 = pneg %p43
        $region14: #{tpu_custom_call.1} parent=11 // pred_check_branch
          %269 = sbr.rel (%p267) target = $region16
        $region15: #{tpu_custom_call.1} parent=11 // pred_region
          _
        $region16: #{tpu_custom_call.1} parent=11 // pred_fallthru
          _
        // Predicated region
        $region17: #{tpu_custom_call.1} parent=11 // pred_check
          %p270 = pneg %p64
        $region18: #{tpu_custom_call.1} parent=11 // pred_check_branch
          %272 = sbr.rel (%p270) target = $region20
        $region19: #{tpu_custom_call.1} parent=11 // pred_region
          _
        $region20: #{tpu_custom_call.1} parent=11 // pred_fallthru
          _
        // Predicated region
        $region21: #{tpu_custom_call.1} parent=11 // pred_check
          %p273 = pneg %p85
        $region22: #{tpu_custom_call.1} parent=11 // pred_check_branch
          %275 = sbr.rel (%p273) target = $region24
        $region23: #{tpu_custom_call.1} parent=11 // pred_region
          _
        $region24: #{tpu_custom_call.1} parent=11 // pred_fallthru
          _
        // Predicated region
        $region25: #{tpu_custom_call.1} parent=11 // pred_check
          %p276 = pneg %p106
        $region26: #{tpu_custom_call.1} parent=11 // pred_check_branch
          %278 = sbr.rel (%p276) target = $region28
        $region27: #{tpu_custom_call.1} parent=11 // pred_region
          _
        $region28: #{tpu_custom_call.1} parent=11 // pred_fallthru
          _
        // Predicated region
        $region29: #{tpu_custom_call.1} parent=11 // pred_check
          %p279 = pneg %p127
        $region30: #{tpu_custom_call.1} parent=11 // pred_check_branch
          %281 = sbr.rel (%p279) target = $region32
        $region31: #{tpu_custom_call.1} parent=11 // pred_region
          _
        $region32: #{tpu_custom_call.1} parent=11 // pred_fallthru
          _
        // Predicated region
        $region33: #{tpu_custom_call.1} parent=11 // pred_check
          %p282 = pneg %p148
        $region34: #{tpu_custom_call.1} parent=11 // pred_check_branch
          %284 = sbr.rel (%p282) target = $region36
        $region35: #{tpu_custom_call.1} parent=11 // pred_region
          _
        $region36: #{tpu_custom_call.1} parent=11 // pred_fallthru
          _
      $region12: #{tpu_custom_call.1} parent=5 // pred_fallthru
        _
      %p285 = scmp.lt.s32.totalorder %s22, 2
      // Predicated region
      $region37: #{tpu_custom_call.1} parent=5 // pred_check
        %p286 = pneg %p285
      $region38: #{tpu_custom_call.1} parent=5 // pred_check_branch
        %288 = sbr.rel (%p286) target = $region40
      $region39: #{tpu_custom_call.1} parent=5 // pred_region
        // Predicated region
        $region41: #{tpu_custom_call.1} parent=39 // pred_check
          %p289 = pneg %p168
        $region42: #{tpu_custom_call.1} parent=39 // pred_check_branch
          %291 = sbr.rel (%p289) target = $region44
        $region43: #{tpu_custom_call.1} parent=39 // pred_region
          %p292 = scmp.lt.s32.totalorder %s22, 1
          %s293 = scalar_select %p292, %s22, 1
          %s294 = smul.addr %s293, 2
          %s295 = smul.addr %s294, 8
          %s296 = scalar_lea.vmem %s6, %s295
        $region44: #{tpu_custom_call.1} parent=39 // pred_fallthru
          _
        // Predicated region
        $region45: #{tpu_custom_call.1} parent=39 // pred_check
          %p297 = pneg %p194
        $region46: #{tpu_custom_call.1} parent=39 // pred_check_branch
          %299 = sbr.rel (%p297) target = $region48
        $region47: #{tpu_custom_call.1} parent=39 // pred_region
          %p300 = scmp.lt.s32.totalorder %s22, 1
          %s301 = scalar_select %p300, %s22, 1
          %s302 = smul.addr %s301, 2
          %s303 = smul.addr %s302, 8
          %s304 = scalar_lea.vmem %s7, %s303
        $region48: #{tpu_custom_call.1} parent=39 // pred_fallthru
          _
      $region40: #{tpu_custom_call.1} parent=5 // pred_fallthru
        _
      %p305 = scmp.le.s32.totalorder 1, %s22
      %p306 = scmp.lt.s32.totalorder %s22, 3
      %p307 = pnand %p305, %p306
      %p308 = pneg %p307
      // Predicated region
      $region49: #{tpu_custom_call.1} parent=5 // pred_check
        _
      $region50: #{tpu_custom_call.1} parent=5 // pred_check_branch
        %310 = sbr.rel (%p307) target = $region52
      $region51: #{tpu_custom_call.1} parent=5 // pred_region
        %s311 = ssub.s32 %s22, 1
        %p312 = pneg %p43
        %p313 = pneg %p40
        %p314 = pneg %p64
        %p315 = pneg %p61
        %p316 = pneg %p85
        %p317 = pneg %p82
        %p318 = pneg %p106
        %p319 = pneg %p103
        %p320 = pneg %p127
        %p321 = pneg %p124
        %p322 = pneg %p148
        %p323 = pneg %p145
        %p324 = scmp.lt.s32.totalorder %s27, 1
        %s325 = scalar_select %p324, %s27, 1
        %s326 = smul.addr %s325, 2
        %s327 = smul.addr %s326, 8
        %s328 = scalar_lea.vmem %s6, %s327
        %p329 = pneg %p174
        %p330 = pneg %p171
        %p331 = scmp.lt.s32.totalorder %s27, 1
        %s332 = scalar_select %p331, %s27, 1
        %s333 = smul.addr %s332, 2
        %s334 = smul.addr %s333, 8
        %s335 = scalar_lea.vmem %s7, %s334
        %p336 = pneg %p200
        %p337 = pneg %p197
        %p338 = pneg %p226
        %p339 = pneg %p223
        %s340 = sand.u32 %s213, 1
        %s341 = scalar_lea.sflag [#allocation3], %s340
        %s342 = sand.u32 %s213, 1
        %s343 = smul.addr %s342, 16
        %s344 = scalar_lea.vmem [#allocation2], %s343
        %p345 = pneg %p252
        %p346 = pneg %p249
        %s347 = sand.u32 %s239, 1
        %s348 = scalar_lea.sflag [#allocation5], %s347
        %s349 = sand.u32 %s239, 1
        %s350 = smul.addr %s349, 16
        %s351 = scalar_lea.vmem [#allocation4], %s350
        %p352 = scmp.lt.s32.totalorder %s27, 1
        %s353 = scalar_select %p352, %s27, 1
        %s354 = smul.addr %s353, 2
        %s355 = smul.addr %s354, 8
        %s356 = scalar_lea.vmem %s6, %s355
        %p357 = scmp.lt.s32.totalorder %s27, 1
        %s358 = scalar_select %p357, %s27, 1
        %s359 = smul.addr %s358, 2
        %s360 = smul.addr %s359, 8
        %s361 = scalar_lea.vmem %s7, %s360
        %v362 = vld [vmem:[%s356] sm:$0xff]
        %v363 = vld [vmem:[%s356 + $0x8] sm:$0xff]
        %v364 = vld [vmem:[%s361] sm:$0xff]
        %v365 = vld [vmem:[%s361 + $0x8] sm:$0xff]
        %v366 = vld [vmem:[%s0] sm:$0xff]
        %v367 = vld [vmem:[%s0 + $0x8] sm:$0xff]
        %v368 = vld [vmem:[%s0 + $0x10] sm:$0xff]
        %v369 = vld [vmem:[%s0 + $0x18] sm:$0xff]
        %v370 = vld [vmem:[%s0 + $0x20] sm:$0xff]
        %v371 = vld [vmem:[%s0 + $0x28] sm:$0xff]
        %v372 = vld [vmem:[%s0 + $0x30] sm:$0xff]
        %v373 = vld [vmem:[%s0 + $0x38] sm:$0xff]
        %v374 = vld [vmem:[%s0 + $0x40] sm:$0xff]
        %v375 = vld [vmem:[%s0 + $0x48] sm:$0xff]
        %v376 = vld [vmem:[%s0 + $0x50] sm:$0xff]
        %v377 = vld [vmem:[%s0 + $0x58] sm:$0xff]
        %v378 = vld [vmem:[%s0 + $0x60] sm:$0xff]
        %v379 = vld [vmem:[%s0 + $0x68] sm:$0xff]
        %v380 = vld [vmem:[%s0 + $0x70] sm:$0xff]
        %v381 = vld [vmem:[%s0 + $0x78] sm:$0xff]
        %v382 = vld [vmem:[%s0 + $0x80] sm:$0xff]
        %v383 = vld [vmem:[%s0 + $0x88] sm:$0xff]
        %v384 = vld [vmem:[%s0 + $0x90] sm:$0xff]
        %v385 = vld [vmem:[%s0 + $0x98] sm:$0xff]
        %v386 = vld [vmem:[%s0 + $0xa0] sm:$0xff]
        %v387 = vld [vmem:[%s0 + $0xa8] sm:$0xff]
        %v388 = vld [vmem:[%s0 + $0xb0] sm:$0xff]
        %v389 = vld [vmem:[%s0 + $0xb8] sm:$0xff]
        %v390 = vld [vmem:[%s0 + $0xc0] sm:$0xff]
        %v391 = vld [vmem:[%s0 + $0xc8] sm:$0xff]
        %v392 = vld [vmem:[%s0 + $0xd0] sm:$0xff]
        %v393 = vld [vmem:[%s0 + $0xd8] sm:$0xff]
        %v394 = vld [vmem:[%s0 + $0xe0] sm:$0xff]
        %v395 = vld [vmem:[%s0 + $0xe8] sm:$0xff]
        %v396 = vld [vmem:[%s0 + $0xf0] sm:$0xff]
        %v397 = vld [vmem:[%s0 + $0xf8] sm:$0xff]
        %398 = vmatprep.subr.mxu0 0.0
        %399 = vmatpush1.msra.mxu0 %v381
        %400 = vmatprep.subr.mxu0 0.0
        %401 = vmatpush1.msra.mxu0 %v380
        %402 = vmatprep.subr.mxu0 0.0
        %403 = vmatpush1.msra.mxu0 %v379
        %404 = vmatprep.subr.mxu0 0.0
        %405 = vmatpush1.msra.mxu0 %v378
        %406 = vmatprep.subr.mxu0 0.0
        %407 = vmatpush1.msra.mxu0 %v377
        %408 = vmatprep.subr.mxu0 0.0
        %409 = vmatpush1.msra.mxu0 %v376
        %410 = vmatprep.subr.mxu0 0.0
        %411 = vmatpush1.msra.mxu0 %v375
        %412 = vmatprep.subr.mxu0 0.0
        %413 = vmatpush1.msra.mxu0 %v374
        %414 = vmatprep.subr.mxu0 0.0
        %415 = vmatpush1.msra.mxu0 %v373
        %416 = vmatprep.subr.mxu0 0.0
        %417 = vmatpush1.msra.mxu0 %v372
        %418 = vmatprep.subr.mxu0 0.0
        %419 = vmatpush1.msra.mxu0 %v371
        %420 = vmatprep.subr.mxu0 0.0
        %421 = vmatpush1.msra.mxu0 %v370
        %422 = vmatprep.subr.mxu0 0.0
        %423 = vmatpush1.msra.mxu0 %v369
        %424 = vmatprep.subr.mxu0 0.0
        %425 = vmatpush1.msra.mxu0 %v368
        %426 = vmatprep.subr.mxu0 0.0
        %427 = vmatpush1.msra.mxu0 %v367
        %428 = vmatprep.subr.mxu0 0.0
        %429 = vmatpush1.msra.mxu0 %v366
        %430 = vmatprep.subr.mxu0 0.0
        %431 = vmatpush2.msra.mxu0 %v397
        %432 = vmatprep.subr.mxu0 0.0
        %433 = vmatpush2.msra.mxu0 %v396
        %434 = vmatprep.subr.mxu0 0.0
        %435 = vmatpush2.msra.mxu0 %v395
        %436 = vmatprep.subr.mxu0 0.0
        %437 = vmatpush2.msra.mxu0 %v394
        %438 = vmatprep.subr.mxu0 0.0
        %439 = vmatpush2.msra.mxu0 %v393
        %440 = vmatprep.subr.mxu0 0.0
        %441 = vmatpush2.msra.mxu0 %v392
        %442 = vmatprep.subr.mxu0 0.0
        %443 = vmatpush2.msra.mxu0 %v391
        %444 = vmatprep.subr.mxu0 0.0
        %445 = vmatpush2.msra.mxu0 %v390
        %446 = vmatprep.subr.mxu0 0.0
        %447 = vmatpush2.msra.mxu0 %v389
        %448 = vmatprep.subr.mxu0 0.0
        %449 = vmatpush2.msra.mxu0 %v388
        %450 = vmatprep.subr.mxu0 0.0
        %451 = vmatpush2.msra.mxu0 %v387
        %452 = vmatprep.subr.mxu0 0.0
        %453 = vmatpush2.msra.mxu0 %v386
        %454 = vmatprep.subr.mxu0 0.0
        %455 = vmatpush2.msra.mxu0 %v385
        %456 = vmatprep.subr.mxu0 0.0
        %457 = vmatpush2.msra.mxu0 %v384
        %458 = vmatprep.subr.mxu0 0.0
        %459 = vmatpush2.msra.mxu0 %v383
        %460 = vmatprep.subr.mxu0 0.0
        %461 = vmatpush2.msra.mxu0 %v382
        %462 = vmatprep.mubr.f32.mxu0 %v363
        %463 = vmatmul.mubr.f32.gmra.mxu0 %v362
        %v464 = vpop.f32.mrf.mxu0
        %v465 = vadd.f32 0.0, %v464
        %v466 = vpop.f32.mrf.mxu0
        %467 = vdwg.mxu0
        %v468 = vld [vmem:[%s1] sm:$0xff]
        %v469 = vld [vmem:[%s1 + $0x8] sm:$0xff]
        %v470 = vld [vmem:[%s1 + $0x10] sm:$0xff]
        %v471 = vld [vmem:[%s1 + $0x18] sm:$0xff]
        %v472 = vld [vmem:[%s1 + $0x20] sm:$0xff]
        %v473 = vld [vmem:[%s1 + $0x28] sm:$0xff]
        %v474 = vld [vmem:[%s1 + $0x30] sm:$0xff]
        %v475 = vld [vmem:[%s1 + $0x38] sm:$0xff]
        %v476 = vld [vmem:[%s1 + $0x40] sm:$0xff]
        %v477 = vld [vmem:[%s1 + $0x48] sm:$0xff]
        %v478 = vld [vmem:[%s1 + $0x50] sm:$0xff]
        %v479 = vld [vmem:[%s1 + $0x58] sm:$0xff]
        %v480 = vld [vmem:[%s1 + $0x60] sm:$0xff]
        %v481 = vld [vmem:[%s1 + $0x68] sm:$0xff]
        %v482 = vld [vmem:[%s1 + $0x70] sm:$0xff]
        %v483 = vld [vmem:[%s1 + $0x78] sm:$0xff]
        %v484 = vld [vmem:[%s1 + $0x80] sm:$0xff]
        %v485 = vld [vmem:[%s1 + $0x88] sm:$0xff]
        %v486 = vld [vmem:[%s1 + $0x90] sm:$0xff]
        %v487 = vld [vmem:[%s1 + $0x98] sm:$0xff]
        %v488 = vld [vmem:[%s1 + $0xa0] sm:$0xff]
        %v489 = vld [vmem:[%s1 + $0xa8] sm:$0xff]
        %v490 = vld [vmem:[%s1 + $0xb0] sm:$0xff]
        %v491 = vld [vmem:[%s1 + $0xb8] sm:$0xff]
        %v492 = vld [vmem:[%s1 + $0xc0] sm:$0xff]
        %v493 = vld [vmem:[%s1 + $0xc8] sm:$0xff]
        %v494 = vld [vmem:[%s1 + $0xd0] sm:$0xff]
        %v495 = vld [vmem:[%s1 + $0xd8] sm:$0xff]
        %v496 = vld [vmem:[%s1 + $0xe0] sm:$0xff]
        %v497 = vld [vmem:[%s1 + $0xe8] sm:$0xff]
        %v498 = vld [vmem:[%s1 + $0xf0] sm:$0xff]
        %v499 = vld [vmem:[%s1 + $0xf8] sm:$0xff]
        %500 = vmatprep.subr.mxu0 0.0
        %501 = vmatpush1.msra.mxu0 %v483
        %502 = vmatprep.subr.mxu0 0.0
        %503 = vmatpush1.msra.mxu0 %v482
        %504 = vmatprep.subr.mxu0 0.0
        %505 = vmatpush1.msra.mxu0 %v481
        %506 = vmatprep.subr.mxu0 0.0
        %507 = vmatpush1.msra.mxu0 %v480
        %508 = vmatprep.subr.mxu0 0.0
        %509 = vmatpush1.msra.mxu0 %v479
        %510 = vmatprep.subr.mxu0 0.0
        %511 = vmatpush1.msra.mxu0 %v478
        %512 = vmatprep.subr.mxu0 0.0
        %513 = vmatpush1.msra.mxu0 %v477
        %514 = vmatprep.subr.mxu0 0.0
        %515 = vmatpush1.msra.mxu0 %v476
        %516 = vmatprep.subr.mxu0 0.0
        %517 = vmatpush1.msra.mxu0 %v475
        %518 = vmatprep.subr.mxu0 0.0
        %519 = vmatpush1.msra.mxu0 %v474
        %520 = vmatprep.subr.mxu0 0.0
        %521 = vmatpush1.msra.mxu0 %v473
        %522 = vmatprep.subr.mxu0 0.0
        %523 = vmatpush1.msra.mxu0 %v472
        %524 = vmatprep.subr.mxu0 0.0
        %525 = vmatpush1.msra.mxu0 %v471
        %526 = vmatprep.subr.mxu0 0.0
        %527 = vmatpush1.msra.mxu0 %v470
        %528 = vmatprep.subr.mxu0 0.0
        %529 = vmatpush1.msra.mxu0 %v469
        %530 = vmatprep.subr.mxu0 0.0
        %531 = vmatpush1.msra.mxu0 %v468
        %532 = vmatprep.subr.mxu0 0.0
        %533 = vmatpush2.msra.mxu0 %v499
        %534 = vmatprep.subr.mxu0 0.0
        %535 = vmatpush2.msra.mxu0 %v498
        %536 = vmatprep.subr.mxu0 0.0
        %537 = vmatpush2.msra.mxu0 %v497
        %538 = vmatprep.subr.mxu0 0.0
        %539 = vmatpush2.msra.mxu0 %v496
        %540 = vmatprep.subr.mxu0 0.0
        %541 = vmatpush2.msra.mxu0 %v495
        %542 = vmatprep.subr.mxu0 0.0
        %543 = vmatpush2.msra.mxu0 %v494
        %544 = vmatprep.subr.mxu0 0.0
        %545 = vmatpush2.msra.mxu0 %v493
        %546 = vmatprep.subr.mxu0 0.0
        %547 = vmatpush2.msra.mxu0 %v492
        %548 = vmatprep.subr.mxu0 0.0
        %549 = vmatpush2.msra.mxu0 %v491
        %550 = vmatprep.subr.mxu0 0.0
        %551 = vmatpush2.msra.mxu0 %v490
        %552 = vmatprep.subr.mxu0 0.0
        %553 = vmatpush2.msra.mxu0 %v489
        %554 = vmatprep.subr.mxu0 0.0
        %555 = vmatpush2.msra.mxu0 %v488
        %556 = vmatprep.subr.mxu0 0.0
        %557 = vmatpush2.msra.mxu0 %v487
        %558 = vmatprep.subr.mxu0 0.0
        %559 = vmatpush2.msra.mxu0 %v486
        %560 = vmatprep.subr.mxu0 0.0
        %561 = vmatpush2.msra.mxu0 %v485
        %562 = vmatprep.subr.mxu0 0.0
        %563 = vmatpush2.msra.mxu0 %v484
        %564 = vmatprep.mubr.f32.mxu0 %v365
        %565 = vmatmul.mubr.f32.gmra.mxu0 %v364
        %v566 = vpop.f32.mrf.mxu0
        %v567 = vadd.f32 0.0, %v566
        %v568 = vpop.f32.mrf.mxu0
        %569 = vdwg.mxu0
        %v570 = vld [vmem:[%s2] sm:$0x3]
        %v572 = vlaneseq
        %v573 = vshrl.u32 %v572, 7
        %v574 = vsub.s32 0, %v573
        %v575 = vrot.slane %v570, %v574
        %v576 = vlaneseq
        %v577 = vshrl.u32 %v576, 7
        %v578 = vsub.s32 1, %v577
        %v579 = vrot.slane %v570, %v578
        %v582 = vmul.f32 %v362, %v575
        %v583 = vmul.f32 %v363, %v579
        %v584 = vadd.f32 %v582, %v583
        %585 = vadd.xlane.f32.xlu0 %v584
        %v586 = vpop.xlane.xlu0 %585
        %v587 = vld [vmem:[%s3] sm:$0x3]
        %v589 = vlaneseq
        %v590 = vshrl.u32 %v589, 7
        %v591 = vsub.s32 0, %v590
        %v592 = vrot.slane %v587, %v591
        %v593 = vlaneseq
        %v594 = vshrl.u32 %v593, 7
        %v595 = vsub.s32 1, %v594
        %v596 = vrot.slane %v587, %v595
        %v599 = vmul.f32 %v364, %v592
        %v600 = vmul.f32 %v365, %v596
        %v601 = vadd.f32 %v599, %v600
        %602 = vadd.xlane.f32.xlu0 %v601
        %v603 = vpop.xlane.xlu0 %602
        %v604 = vmax.f32 %v586, %v603
        %v605 = vsub.f32 %v586, %v604
        %v606 = vmul.f32 %v605, 1.442695
        %v607 = vpow.pop %v606
        %v608 = vsub.f32 %v603, %v604
        %v609 = vmul.f32 %v608, 1.442695
        %v610 = vpow.pop %v609
        %v611 = vadd.f32 %v607, %v610
        %v612 = vrcp.pop %v611
        %v613 = vmul.f32 1.0, %v612
        %v614 = vmul.f32 %v607, %v613
        %v615 = vmul.f32 %v610, %v613
        %vm616 = vcmask 64512
        %v617 = vsel %vm616, %v465, -inf
        %618 = vmax.xlane.f32.xlu0 %v617
        %v619 = vpop.xlane.xlu0 %618
        %v620 = vsub.f32 %v465, %v619
        %v621 = vmul.f32 %v620, 1.442695
        %v622 = vpow.pop %v621
        %v623 = vsel %vm616, %v622, 0.0
        %624 = vadd.xlane.f32.xlu0 %v623
        %v625 = vpop.xlane.xlu0 %624
        %v626 = vrcp.pop %v625
        %v627 = vmul.f32 %v622, %v626
        %v628 = vsel %vm616, %v567, -inf
        %629 = vmax.xlane.f32.xlu0 %v628
        %v630 = vpop.xlane.xlu0 %629
        %v631 = vsub.f32 %v567, %v630
        %v632 = vmul.f32 %v631, 1.442695
        %v633 = vpow.pop %v632
        %v634 = vsel %vm616, %v633, 0.0
        %635 = vadd.xlane.f32.xlu0 %v634
        %v636 = vpop.xlane.xlu0 %635
        %v637 = vrcp.pop %v636
        %v638 = vmul.f32 %v633, %v637
        %v639 = vmul.f32 %v614, %v627
        %v640 = vld [vmem:[%s4] sm:$0xff]
        %v641 = vld [vmem:[%s4 + $0x8] sm:$0xff]
        %v643 = vsel %vm616, %v639, 0
        %645 = vmatprep.subr.mxu0 0.0
        %646 = vmatpush1.msra.mxu0 0.0
        %647 = vmatprep.subr.mxu0 0.0
        %648 = vmatpush1.msra.mxu0 0.0
        %649 = vmatprep.subr.mxu0 0.0
        %650 = vmatpush1.msra.mxu0 0.0
        %651 = vmatprep.subr.mxu0 0.0
        %652 = vmatpush1.msra.mxu0 0.0
        %653 = vmatprep.subr.mxu0 0.0
        %654 = vmatpush1.msra.mxu0 0.0
        %655 = vmatprep.subr.mxu0 0.0
        %656 = vmatpush1.msra.mxu0 0.0
        %657 = vmatprep.subr.mxu0 0.0
        %658 = vmatpush1.msra.mxu0 0.0
        %659 = vmatprep.subr.mxu0 0.0
        %660 = vmatpush1.msra.mxu0 0.0
        %661 = vmatprep.subr.mxu0 0.0
        %662 = vmatpush1.msra.mxu0 0.0
        %663 = vmatprep.subr.mxu0 0.0
        %664 = vmatpush1.msra.mxu0 0.0
        %665 = vmatprep.subr.mxu0 0.0
        %666 = vmatpush1.msra.mxu0 0.0
        %667 = vmatprep.subr.mxu0 0.0
        %668 = vmatpush1.msra.mxu0 0.0
        %669 = vmatprep.subr.mxu0 0.0
        %670 = vmatpush1.msra.mxu0 0.0
        %671 = vmatprep.subr.mxu0 0.0
        %672 = vmatpush1.msra.mxu0 0.0
        %673 = vmatprep.subr.mxu0 0.0
        %674 = vmatpush1.msra.mxu0 0.0
        %675 = vmatprep.subr.mxu0 %v641
        %676 = vmatpush1.msra.mxu0 %v640
        %677 = vmatprep.subr.mxu0 0.0
        %678 = vmatpush2.msra.mxu0 0.0
        %679 = vmatprep.subr.mxu0 0.0
        %680 = vmatpush2.msra.mxu0 0.0
        %681 = vmatprep.subr.mxu0 0.0
        %682 = vmatpush2.msra.mxu0 0.0
        %683 = vmatprep.subr.mxu0 0.0
        %684 = vmatpush2.msra.mxu0 0.0
        %685 = vmatprep.subr.mxu0 0.0
        %686 = vmatpush2.msra.mxu0 0.0
        %687 = vmatprep.subr.mxu0 0.0
        %688 = vmatpush2.msra.mxu0 0.0
        %689 = vmatprep.subr.mxu0 0.0
        %690 = vmatpush2.msra.mxu0 0.0
        %691 = vmatprep.subr.mxu0 0.0
        %692 = vmatpush2.msra.mxu0 0.0
        %693 = vmatprep.subr.mxu0 0.0
        %694 = vmatpush2.msra.mxu0 0.0
        %695 = vmatprep.subr.mxu0 0.0
        %696 = vmatpush2.msra.mxu0 0.0
        %697 = vmatprep.subr.mxu0 0.0
        %698 = vmatpush2.msra.mxu0 0.0
        %699 = vmatprep.subr.mxu0 0.0
        %700 = vmatpush2.msra.mxu0 0.0
        %701 = vmatprep.subr.mxu0 0.0
        %702 = vmatpush2.msra.mxu0 0.0
        %703 = vmatprep.subr.mxu0 0.0
        %704 = vmatpush2.msra.mxu0 0.0
        %705 = vmatprep.subr.mxu0 0.0
        %706 = vmatpush2.msra.mxu0 0.0
        %707 = vmatprep.subr.mxu0 0.0
        %708 = vmatpush2.msra.mxu0 0.0
        %709 = vmatprep.mubr.f32.mxu0 0.0
        %710 = vmatmul.mubr.f32.gmra.mxu0 %v643
        %v711 = vpop.f32.mrf.mxu0
        %v712 = vadd.f32 0.0, %v711
        %v713 = vpop.f32.mrf.mxu0
        %v714 = vadd.f32 0.0, %v713
        %715 = vdwg.mxu0
        %v716 = vmul.f32 %v615, %v638
        %v717 = vld [vmem:[%s5] sm:$0xff]
        %v718 = vld [vmem:[%s5 + $0x8] sm:$0xff]
        %v720 = vsel %vm616, %v716, 0
        %722 = vmatprep.subr.mxu0 0.0
        %723 = vmatpush1.msra.mxu0 0.0
        %724 = vmatprep.subr.mxu0 0.0
        %725 = vmatpush1.msra.mxu0 0.0
        %726 = vmatprep.subr.mxu0 0.0
        %727 = vmatpush1.msra.mxu0 0.0
        %728 = vmatprep.subr.mxu0 0.0
        %729 = vmatpush1.msra.mxu0 0.0
        %730 = vmatprep.subr.mxu0 0.0
        %731 = vmatpush1.msra.mxu0 0.0
        %732 = vmatprep.subr.mxu0 0.0
        %733 = vmatpush1.msra.mxu0 0.0
        %734 = vmatprep.subr.mxu0 0.0
        %735 = vmatpush1.msra.mxu0 0.0
        %736 = vmatprep.subr.mxu0 0.0
        %737 = vmatpush1.msra.mxu0 0.0
        %738 = vmatprep.subr.mxu0 0.0
        %739 = vmatpush1.msra.mxu0 0.0
        %740 = vmatprep.subr.mxu0 0.0
        %741 = vmatpush1.msra.mxu0 0.0
        %742 = vmatprep.subr.mxu0 0.0
        %743 = vmatpush1.msra.mxu0 0.0
        %744 = vmatprep.subr.mxu0 0.0
        %745 = vmatpush1.msra.mxu0 0.0
        %746 = vmatprep.subr.mxu0 0.0
        %747 = vmatpush1.msra.mxu0 0.0
        %748 = vmatprep.subr.mxu0 0.0
        %749 = vmatpush1.msra.mxu0 0.0
        %750 = vmatprep.subr.mxu0 0.0
        %751 = vmatpush1.msra.mxu0 0.0
        %752 = vmatprep.subr.mxu0 %v718
        %753 = vmatpush1.msra.mxu0 %v717
        %754 = vmatprep.subr.mxu0 0.0
        %755 = vmatpush2.msra.mxu0 0.0
        %756 = vmatprep.subr.mxu0 0.0
        %757 = vmatpush2.msra.mxu0 0.0
        %758 = vmatprep.subr.mxu0 0.0
        %759 = vmatpush2.msra.mxu0 0.0
        %760 = vmatprep.subr.mxu0 0.0
        %761 = vmatpush2.msra.mxu0 0.0
        %762 = vmatprep.subr.mxu0 0.0
        %763 = vmatpush2.msra.mxu0 0.0
        %764 = vmatprep.subr.mxu0 0.0
        %765 = vmatpush2.msra.mxu0 0.0
        %766 = vmatprep.subr.mxu0 0.0
        %767 = vmatpush2.msra.mxu0 0.0
        %768 = vmatprep.subr.mxu0 0.0
        %769 = vmatpush2.msra.mxu0 0.0
        %770 = vmatprep.subr.mxu0 0.0
        %771 = vmatpush2.msra.mxu0 0.0
        %772 = vmatprep.subr.mxu0 0.0
        %773 = vmatpush2.msra.mxu0 0.0
        %774 = vmatprep.subr.mxu0 0.0
        %775 = vmatpush2.msra.mxu0 0.0
        %776 = vmatprep.subr.mxu0 0.0
        %777 = vmatpush2.msra.mxu0 0.0
        %778 = vmatprep.subr.mxu0 0.0
        %779 = vmatpush2.msra.mxu0 0.0
        %780 = vmatprep.subr.mxu0 0.0
        %781 = vmatpush2.msra.mxu0 0.0
        %782 = vmatprep.subr.mxu0 0.0
        %783 = vmatpush2.msra.mxu0 0.0
        %784 = vmatprep.subr.mxu0 0.0
        %785 = vmatpush2.msra.mxu0 0.0
        %786 = vmatprep.mubr.f32.mxu0 0.0
        %787 = vmatmul.mubr.f32.gmra.mxu0 %v720
        %v788 = vpop.f32.mrf.mxu0
        %v789 = vadd.f32 0.0, %v788
        %v790 = vpop.f32.mrf.mxu0
        %v791 = vadd.f32 0.0, %v790
        %792 = vdwg.mxu0
        %v793 = vmul.f32 %v712, %v362
        %v794 = vmul.f32 %v714, %v363
        %795 = vst [vmem:[%s344] sm:$0xff] %v793
        %796 = vst [vmem:[%s344 + $0x8] sm:$0xff] %v794
        %v797 = vld [vmem:[%s361] sm:$0xff]
        %v798 = vld [vmem:[%s361 + $0x8] sm:$0xff]
        %v799 = vmul.f32 %v789, %v797
        %v800 = vmul.f32 %v791, %v798
        %801 = vst [vmem:[%s351] sm:$0xff] %v799
        %802 = vst [vmem:[%s351 + $0x8] sm:$0xff] %v800
        %s803 = sand.u32 %s213, 1
        %s804 = scalar_lea.sflag [#allocation3], %s803
        %s805 = sand.u32 %s213, 1
        %s806 = smul.addr %s805, 16
        %s807 = scalar_lea.vmem [#allocation2], %s806
        %s808 = sand.u32 %s239, 1
        %s809 = scalar_lea.sflag [#allocation5], %s808
        %s810 = sand.u32 %s239, 1
        %s811 = smul.addr %s810, 16
        %s812 = scalar_lea.vmem [#allocation4], %s811
        // Predicated region
        $region53: #{tpu_custom_call.1} parent=51 // pred_check
          %p813 = pneg %p223
        $region54: #{tpu_custom_call.1} parent=51 // pred_check_branch
          %815 = sbr.rel (%p813) target = $region56
        $region55: #{tpu_custom_call.1} parent=51 // pred_region
          %s817 = ssub.s32 256, 256
          %818 = vsyncadd %s804, %s817
          %s819 = smul.addr %s27, 2
          %s820 = smul.addr %s819, 128
          %s821 = scalar_lea.hbm %s8, %s820
          %s823 = sshll.u32 %s807, 4
          %s824 = int_to_ptr.vmem [resolvable:$true] %s823
          %826 = dma.vmem_to_hbm [thread:$0]  %s824, 256, %s821, %s804
        $region56: #{tpu_custom_call.1} parent=51 // pred_fallthru
          _
        // Predicated region
        $region57: #{tpu_custom_call.1} parent=51 // pred_check
          %p827 = pneg %p249
        $region58: #{tpu_custom_call.1} parent=51 // pred_check_branch
          %829 = sbr.rel (%p827) target = $region60
        $region59: #{tpu_custom_call.1} parent=51 // pred_region
          %s831 = ssub.s32 256, 256
          %832 = vsyncadd %s809, %s831
          %s833 = smul.addr %s27, 2
          %s834 = smul.addr %s833, 128
          %s835 = scalar_lea.hbm %s9, %s834
          %s837 = sshll.u32 %s812, 4
          %s838 = int_to_ptr.vmem [resolvable:$true] %s837
          %840 = dma.vmem_to_hbm [thread:$0]  %s838, 256, %s835, %s809
        $region60: #{tpu_custom_call.1} parent=51 // pred_fallthru
          _
      $region52: #{tpu_custom_call.1} parent=5 // pred_fallthru
        _
      %p841 = scmp.le.s32.totalorder 2, %s22
      // Predicated region
      $region61: #{tpu_custom_call.1} parent=5 // pred_check
        %p842 = pneg %p841
      $region62: #{tpu_custom_call.1} parent=5 // pred_check_branch
        %844 = sbr.rel (%p842) target = $region64
      $region63: #{tpu_custom_call.1} parent=5 // pred_region
        %s845 = ssub.s32 %s22, 2
        // Predicated region
        $region65: #{tpu_custom_call.1} parent=63 // pred_check
          %p846 = pneg %p229
        $region66: #{tpu_custom_call.1} parent=63 // pred_check_branch
          %848 = sbr.rel (%p846) target = $region68
        $region67: #{tpu_custom_call.1} parent=63 // pred_region
          %s849 = sand.u32 %s214, 1
          %s850 = scalar_lea.sflag [#allocation3], %s849
          %s851 = sand.u32 %s214, 1
          %s852 = smul.addr %s851, 16
          %s853 = scalar_lea.vmem [#allocation2], %s852
          %854 = dma.done %s850, 256
        $region68: #{tpu_custom_call.1} parent=63 // pred_fallthru
          _
        // Predicated region
        $region69: #{tpu_custom_call.1} parent=63 // pred_check
          %p855 = pneg %p255
        $region70: #{tpu_custom_call.1} parent=63 // pred_check_branch
          %857 = sbr.rel (%p855) target = $region72
        $region71: #{tpu_custom_call.1} parent=63 // pred_region
          %s858 = sand.u32 %s240, 1
          %s859 = scalar_lea.sflag [#allocation5], %s858
          %s860 = sand.u32 %s240, 1
          %s861 = smul.addr %s860, 16
          %s862 = scalar_lea.vmem [#allocation4], %s861
          %863 = dma.done %s859, 256
        $region72: #{tpu_custom_call.1} parent=63 // pred_fallthru
          _
      $region64: #{tpu_custom_call.1} parent=5 // pred_fallthru
        _
    $region6: #{tpu_custom_call.1} parent=1 // loop_footer
      %s26 = sadd.s32 1, %s22
    $region7: #{tpu_custom_call.1} parent=1 // loop_footer_branch
      %21 = sbr.rel target = $region3
    $region8: #{tpu_custom_call.1} parent=1 // loop_exit
      _
    %864 = vsyncpa [#allocation3], 1
    %s865 = scalar_lea.sflag [#allocation3], 1
    %866 = vsyncpa %s865, 1
    %867 = vsyncpa [#allocation5], 1
    %s868 = scalar_lea.sflag [#allocation5], 1
    %869 = vsyncpa %s868, 1

</llo_original>
